<compile_context>
chip_gen: v5e
topology: v5e:2x2
jax: 0.10.0
libtpu: 0.0.40
codegen_flags: <defaults>
</compile_context>

<pallas_src>
import math

import jax
import jax.numpy as jnp
from jax.experimental import pallas as pl
from jax.experimental.pallas import tpu as pltpu


def _glorep_sum_kernel(doc_ref, out_ref):
    # doc_ref: (block_rows, Lp, Cp) block of (lane-dense repacked) documents.
    # out_ref: (block_rows, Cp) lane-dense output slab.
    #
    # softmax over a size-1 axis => attention weights are exactly 1.0, so the
    # output is simply the sum over the (packed) query-length axis.  Accumulate
    # in f32 without materializing a full-block f32 copy of the input.
    out_ref[...] = jnp.sum(
        doc_ref[...], axis=1, dtype=jnp.float32).astype(out_ref.dtype)


def _round_up(x, m):
    return ((x + m - 1) // m) * m


def _choose_block_rows(n, lp, cp, itemsize):
    """Pick the per-grid-step row-block size from the PADDED VMEM footprint.

    Per row, the VMEM tile occupies round_up(Lp, sublanes) * round_up(Cp, 128)
    * itemsize bytes (sublanes = 8 for f32, 16 for bf16, 32 for int8).  We keep
    each input buffer under ~4 MiB (x2 for double buffering, plus a small
    double-buffered output slab), which fits every generation's scoped VMEM
    default (v5e 16 MiB, v6e/v7x 32 MiB) and already reaches ~85% of the HBM
    roofline per the measured tiling table.  We also aim for >= 4 grid steps
    so both v7x TensorCores pipeline >= 2 steps each.
    """
    sublanes = max(8, 32 // itemsize)
    padded_row_bytes = _round_up(lp, sublanes) * _round_up(cp, 128) * itemsize
    budget = 4 * 1024 * 1024                      # per input buffer (x2 pipelining)
    max_rows = max(8, budget // padded_row_bytes)
    # TODO(synk): for extremely large L*D a single 8-row block can still exceed
    # the budget; that regime would need tiling the L axis as well.
    target = min(max_rows, max(8, pl.cdiv(n, 4)))  # >= 4 steps when N allows
    if target >= n:
        return n                                   # block == full dim, always legal
    return max(8, (target // 8) * 8)               # sublane-aligned row blocks


def glo_rep_attention(doc_rep, w1=None, b1=None, w2=None, b2=None, u_w=None,
                      *, block_rows=None):
    """doc_rep: (..., L, D), e.g. (BS, 100, Q_len, word_dim) as in the module.

    Returns gloDoc of shape (..., 1, D).  The MLP / u_w parameters are
    accepted for interface parity but do not affect the output (softmax over
    the trailing size-1 axis is identically 1.0).
    """
    *lead, L, D = doc_rep.shape
    N = 1
    for s in lead:
        N *= s
    x = doc_rep.reshape(N, L, D)

    # Lane-dense repacking: contiguous (zero-copy) reshape that groups k
    # consecutive L-rows into one 128-wide lane row.  Chunk c of the packed
    # per-row sum then holds sum_m x[n, m*k + c, :]; the wrapper folds chunks.
    k = 1
    if D < 128 and 128 % D == 0:
        cand = 128 // D
        if L % cand == 0:
            k = cand
    Lp, Cp = L // k, k * D
    if k > 1:
        x = x.reshape(N, Lp, Cp)

    if block_rows is None:
        block_rows = _choose_block_rows(N, Lp, Cp, x.dtype.itemsize)

    grid = (pl.cdiv(N, block_rows),)
    out = pl.pallas_call(
        _glorep_sum_kernel,
        out_shape=jax.ShapeDtypeStruct((N, Cp), doc_rep.dtype),
        grid_spec=pl.GridSpec(
            grid=grid,
            in_specs=[pl.BlockSpec((block_rows, Lp, Cp), lambda i: (i, 0, 0))],
            out_specs=pl.BlockSpec((block_rows, Cp), lambda i: (i, 0)),
        ),
        compiler_params=pltpu.CompilerParams(
            dimension_semantics=("parallel",)),
    )(x)

    if k > 1:
        # Fold the k interleaved D-wide partial sums (per-row op, so the
        # masked ragged last block cannot leak padded rows into valid ones).
        out = jnp.sum(out.reshape(N, k, D), axis=1)
    return out.reshape(*lead, 1, D)


def init_params(key, word_dim, hidden_size, dtype=jnp.float32):
    """Deterministic init mimicking the PyTorch module's __init__."""
    k_uw, k_w1, k_b1, k_w2, k_b2 = jax.random.split(key, 5)
    # u_w ~ U(-0.1, 0.1), shape (1, 1, 1, word_dim) -> stored as (1, word_dim)
    u_w = jax.random.uniform(k_uw, (1, word_dim), dtype, -0.1, 0.1)
    # nn.Linear default init: U(-1/sqrt(fan_in), 1/sqrt(fan_in))
    bound1 = 1.0 / math.sqrt(word_dim)
    w1 = jax.random.uniform(k_w1, (word_dim, hidden_size), dtype, -bound1, bound1)
    b1 = jax.random.uniform(k_b1, (1, hidden_size), dtype, -bound1, bound1)
    bound2 = 1.0 / math.sqrt(hidden_size)
    w2 = jax.random.uniform(k_w2, (hidden_size, word_dim), dtype, -bound2, bound2)
    b2 = jax.random.uniform(k_b2, (1, word_dim), dtype, -bound2, bound2)
    return w1, b1, w2, b2, u_w


def reference(doc_rep, w1, b1, w2, b2, u_w):
    """Pure-JAX reference of the full torch forward (MLP + softmax kept)."""
    u_t = jnp.tanh(doc_rep @ w1 + b1) @ w2 + b2                  # (..., L, D)
    logits = jnp.einsum("...ld,xd->...lx", u_t, u_w)             # (..., L, 1)
    weights = jax.nn.softmax(logits, axis=-1)                    # (..., L, 1)
    glo = jnp.einsum("...lx,...ld->...xd", weights, doc_rep)     # (..., 1, D)
    return glo


if __name__ == "__main__":
    batch_size = 2
    num_windows = 4        # the "100" axis of the torch docstring, kept small
    query_length = 8
    word_dim = 32
    hidden_size = 32

    key = jax.random.PRNGKey(0)
    k_doc, k_params = jax.random.split(key)
    doc_rep = jax.random.normal(
        k_doc, (batch_size, num_windows, query_length, word_dim),
        dtype=jnp.float32)
    w1, b1, w2, b2, u_w = init_params(k_params, word_dim, hidden_size)

    glo = glo_rep_attention(doc_rep, w1, b1, w2, b2, u_w)
    glo = jax.block_until_ready(glo)

    ref = reference(doc_rep, w1, b1, w2, b2, u_w)
    assert glo.shape == (batch_size, num_windows, 1, word_dim), glo.shape
    assert jnp.allclose(glo, ref, atol=1e-5, rtol=1e-5), (
        float(jnp.max(jnp.abs(glo - ref))))

    print("KERNEL_OK")
</pallas_src>

<mosaic_0001>
module attributes {stable_mosaic.version = 11 : i64} {
  func.func @_glorep_sum_kernel(%arg0: i32, %arg1: memref<8x2x128xf32, #tpu.memory_space<vmem>>, %arg2: memref<8x128xf32, #tpu.memory_space<vmem>>) attributes {dimension_semantics = [#tpu.dimension_semantics<parallel>], iteration_bounds = array<i64: 1>, scalar_prefetch = 0 : i64, scratch_operands = 0 : i64, tpu.core_type = #tpu.core_type<tc>, window_params = [{transform_indices = @transform_0, window_bounds = array<i64: 8, 2, 128>}, {transform_indices = @transform_1, window_bounds = array<i64: 8, 128>}]} {
    %c0 = arith.constant 0 : index
    %c0_0 = arith.constant 0 : index
    %c0_1 = arith.constant 0 : index
    %0 = vector.load %arg1[%c0, %c0_0, %c0_1] : memref<8x2x128xf32, #tpu.memory_space<vmem>>, vector<8x2x128xf32>
    %cst = arith.constant dense<0.000000e+00> : vector<8x128xf32>
    %1 = vector.multi_reduction <add>, %0, %cst [1] : vector<8x2x128xf32> to vector<8x128xf32>
    %c0_2 = arith.constant 0 : index
    %c0_3 = arith.constant 0 : index
    %2 = vector.load %arg2[%c0_2, %c0_3] : memref<8x128xf32, #tpu.memory_space<vmem>>, vector<8x128xf32>
    tpu.vector_store %arg2[%c0_2, %c0_3], %1 {strides = array<i32>} : memref<8x128xf32, #tpu.memory_space<vmem>>, vector<8x128xf32>,
    return
  }
  func.func @transform_0(%arg0: i32) -> (i32, i32, i32) {
    %c0_i32 = arith.constant 0 : i32
    %c0_i32_0 = arith.constant 0 : i32
    %c0_i32_1 = arith.constant 0 : i32
    return %arg0, %c0_i32, %c0_i32_0 : i32, i32, i32
  }
  func.func @transform_1(%arg0: i32) -> (i32, i32) {
    %c0_i32 = arith.constant 0 : i32
    %c0_i32_0 = arith.constant 0 : i32
    return %arg0, %c0_i32 : i32, i32
  }
}

</mosaic_0001>

<llo_original>
// kernel: tpu_custom_call.1
$region0: #{tpu_custom_call.1}
  #allocation0 [shape = 'u32[]', space=smem, size = 0x4, offset = 0x4, fixed_abs, tag = 'smem constant byte address 0x4 - core index']
  #allocation1 [shape = 'u32[72,128]{1,0:T(1,128)}', space=vmem, size = 0x9000, scoped, tag = 'internal scratch']
  %s0 = inlined_call_operand.hbm [shape: f32[8,2,128], index: 0, kind: input, shape index: {}]
  %s1 = inlined_call_operand.hbm [shape: f32[8,128], index: 1, kind: output, shape index: {}]
  %s2 = sld [smem:[#allocation0]]
  $region18: #{tpu_custom_call.1} parent=0
    _
  %s4 = ssub.s32 1, %s2
  %s5 = scalar_select 0, %s4, %s2
  $region1: #{tpu_custom_call.1} parent=0
    #allocation2 [shape = 'u8[8192]{0}', space=vmem, size = 0x2000, scoped, tag = 'input window, operand 0, single buffered']
    #allocation3 [shape = 's32[1]{0}', space=sflag, size = 0x4, scoped, tag = 'scoped memory for tpu_custom_call.1']
    #allocation4 [shape = 's32[1]{0}', space=sflag, size = 0x4, scoped, tag = 'scoped memory for tpu_custom_call.1']
    #allocation5 [shape = 'u8[4096]{0}', space=vmem, size = 0x1000, scoped, tag = 'output window, operand 0, single buffered']
    %6 = vsyncpa [#allocation3], 0
    %7 = vsyncpa [#allocation4], 0
    // Predicated region
    $region2: #{tpu_custom_call.1} parent=1 // pred_check
      _
    $region3: #{tpu_custom_call.1} parent=1 // pred_check_branch
      %9 = sbr.rel (0) target = $region5
    $region4: #{tpu_custom_call.1} parent=1 // pred_region
      %11 = vsyncadd [#allocation3], 0
      %s12 = sshll.u32 %s0, 4
      %s13 = int_to_ptr.hbm [resolvable:$true] %s12
      %s14 = sshll.u32 [#allocation2], 4
      %s15 = int_to_ptr.vmem [resolvable:$true] %s14
      %20 = dma.hbm_to_vmem [thread:$0]  %s13, 256, %s15, [#allocation3], 32, 32, 2
    $region5: #{tpu_custom_call.1} parent=1 // pred_fallthru
      _
    // Predicated region
    $region6: #{tpu_custom_call.1} parent=1 // pred_check
      _
    $region7: #{tpu_custom_call.1} parent=1 // pred_check_branch
      %22 = sbr.rel (0) target = $region9
    $region8: #{tpu_custom_call.1} parent=1 // pred_region
      %24 = dma.done [#allocation3], 256
    $region9: #{tpu_custom_call.1} parent=1 // pred_fallthru
      _
    %v25 = vld [vmem:[#allocation2] sm:$0x3]
    %v26 = vld [vmem:[#allocation2 + $0x2] sm:$0x3]
    %v27 = vld [vmem:[#allocation2 + $0x4] sm:$0x3]
    %v28 = vld [vmem:[#allocation2 + $0x6] sm:$0x3]
    %v29 = vld [vmem:[#allocation2 + $0x8] sm:$0x3]
    %v30 = vld [vmem:[#allocation2 + $0xa] sm:$0x3]
    %v31 = vld [vmem:[#allocation2 + $0xc] sm:$0x3]
    %v32 = vld [vmem:[#allocation2 + $0xe] sm:$0x3]
    %vm33 = vcmask 1041408
    %v34 = vsel %vm33, %v25, 0.0
    %v35 = vrot.slane %v34, 4
    %v36 = vadd.f32 %v34, %v35
    %v37 = vrot.slane %v36, 2
    %v38 = vadd.f32 %v36, %v37
    %v39 = vrot.slane %v38, 1
    %v40 = vadd.f32 %v38, %v39
    %v41 = vsel %vm33, %v26, 0.0
    %v42 = vrot.slane %v41, 4
    %v43 = vadd.f32 %v41, %v42
    %v44 = vrot.slane %v43, 2
    %v45 = vadd.f32 %v43, %v44
    %v46 = vrot.slane %v45, 1
    %v47 = vadd.f32 %v45, %v46
    %v48 = vsel %vm33, %v27, 0.0
    %v49 = vrot.slane %v48, 4
    %v50 = vadd.f32 %v48, %v49
    %v51 = vrot.slane %v50, 2
    %v52 = vadd.f32 %v50, %v51
    %v53 = vrot.slane %v52, 1
    %v54 = vadd.f32 %v52, %v53
    %v55 = vsel %vm33, %v28, 0.0
    %v56 = vrot.slane %v55, 4
    %v57 = vadd.f32 %v55, %v56
    %v58 = vrot.slane %v57, 2
    %v59 = vadd.f32 %v57, %v58
    %v60 = vrot.slane %v59, 1
    %v61 = vadd.f32 %v59, %v60
    %v62 = vsel %vm33, %v29, 0.0
    %v63 = vrot.slane %v62, 4
    %v64 = vadd.f32 %v62, %v63
    %v65 = vrot.slane %v64, 2
    %v66 = vadd.f32 %v64, %v65
    %v67 = vrot.slane %v66, 1
    %v68 = vadd.f32 %v66, %v67
    %v69 = vsel %vm33, %v30, 0.0
    %v70 = vrot.slane %v69, 4
    %v71 = vadd.f32 %v69, %v70
    %v72 = vrot.slane %v71, 2
    %v73 = vadd.f32 %v71, %v72
    %v74 = vrot.slane %v73, 1
    %v75 = vadd.f32 %v73, %v74
    %v76 = vsel %vm33, %v31, 0.0
    %v77 = vrot.slane %v76, 4
    %v78 = vadd.f32 %v76, %v77
    %v79 = vrot.slane %v78, 2
    %v80 = vadd.f32 %v78, %v79
    %v81 = vrot.slane %v80, 1
    %v82 = vadd.f32 %v80, %v81
    %v83 = vsel %vm33, %v32, 0.0
    %v84 = vrot.slane %v83, 4
    %v85 = vadd.f32 %v83, %v84
    %v86 = vrot.slane %v85, 2
    %v87 = vadd.f32 %v85, %v86
    %v88 = vrot.slane %v87, 1
    %v89 = vadd.f32 %v87, %v88
    %vm98 = vcmask 1041409
    %v99 = vsel %vm98, %v47, %v40
    %vm100 = vcmask 1042434
    %v101 = vsel %vm100, %v54, %v99
    %vm102 = vcmask 1043459
    %v103 = vsel %vm102, %v61, %v101
    %vm104 = vcmask 1044484
    %v105 = vsel %vm104, %v68, %v103
    %vm106 = vcmask 1045509
    %v107 = vsel %vm106, %v75, %v105
    %vm108 = vcmask 1046534
    %v109 = vsel %vm108, %v82, %v107
    %vm110 = vcmask 1047559
    %v111 = vsel %vm110, %v89, %v109
    %113 = vst [vmem:[#allocation5] sm:$0xff] %v111
    // Predicated region
    $region10: #{tpu_custom_call.1} parent=1 // pred_check
      _
    $region11: #{tpu_custom_call.1} parent=1 // pred_check_branch
      %115 = sbr.rel (0) target = $region13
    $region12: #{tpu_custom_call.1} parent=1 // pred_region
      %117 = vsyncadd [#allocation4], 0
      %s119 = sshll.u32 [#allocation5], 4
      %s120 = int_to_ptr.vmem [resolvable:$true] %s119
      %s121 = sshll.u32 %s1, 4
      %s122 = int_to_ptr.hbm [resolvable:$true] %s121
      %124 = dma.vmem_to_hbm [thread:$0]  %s120, 128, %s122, [#allocation4]
    $region13: #{tpu_custom_call.1} parent=1 // pred_fallthru
      _
    // Predicated region
    $region14: #{tpu_custom_call.1} parent=1 // pred_check
      _
    $region15: #{tpu_custom_call.1} parent=1 // pred_check_branch
      %126 = sbr.rel (0) target = $region17
    $region16: #{tpu_custom_call.1} parent=1 // pred_region
      %128 = dma.done [#allocation4], 128
    $region17: #{tpu_custom_call.1} parent=1 // pred_fallthru
      _
    %129 = vsyncpa [#allocation3], 1
    %130 = vsyncpa [#allocation4], 1

</llo_original>
